<compile_context>
chip_gen: v5e
topology: v5e:2x2
jax: 0.10.0
libtpu: 0.0.40
codegen_flags: <defaults>
</compile_context>

<pallas_src>
import functools

import jax
import jax.numpy as jnp
from jax.experimental import pallas as pl
from jax.experimental.pallas import tpu as pltpu


def _round_up(n, m):
    return ((n + m - 1) // m) * m


def _predictor_kernel(x_ref, w1_ref, b1_ref, w2_ref, b2_ref, o_ref, *, num_labels):
    # Hot path: two MXU matmuls + bias + ReLU on the current batch tile.
    x = x_ref[...]                                                      # (tb, dim)
    h = jnp.dot(x, w1_ref[...], preferred_element_type=jnp.float32)    # (tb, hidden) f32
    h = h + b1_ref[...].astype(jnp.float32)                             # broadcast (1, hidden)
    # TODO(synk): Dropout(p=0.1) is eval-mode identity here (inference semantics);
    # training-mode masking would need pltpu.prng_seed/prng_random_bits.
    h = jnp.maximum(h, 0.0)                                              # ReLU (f32 VPU path)
    h = h.astype(w2_ref.dtype)
    o = jnp.dot(h, w2_ref[...], preferred_element_type=jnp.float32)    # (tb, n_pad) f32
    o = o + b2_ref[...].astype(jnp.float32)
    # Store only the real labels: narrow store, tiny HBM writeback (no padded zeros).
    o_ref[...] = o[:, :num_labels].astype(o_ref.dtype)


def predictor_forward(feats, w1, b1, w2, b2, *, tile_b=None):
    """feats: (B, dim); w1: (dim, hidden); b1: (hidden,) or (1, hidden);
    w2: (hidden, num_labels); b2: (num_labels,) or (1, num_labels).
    Weights stored (in_features, out_features), i.e. x @ W + b."""
    B, dim = feats.shape
    hidden = w1.shape[1]
    num_labels = w2.shape[1]
    isz = feats.dtype.itemsize
    wsz = w1.dtype.itemsize
    osz = isz  # output dtype follows feats dtype

    b1 = b1.reshape(1, hidden)
    b2 = b2.reshape(1, num_labels)

    # ---- Pad W2/b2 out-features to 128 lanes for MXU compute ONLY (kept in VMEM,
    #      never written back padded). ----
    n_pad = _round_up(max(num_labels, 128), 128)
    if n_pad != num_labels:
        w2p = jnp.zeros((hidden, n_pad), dtype=w2.dtype).at[:, :num_labels].set(w2)
        b2p = jnp.zeros((1, n_pad), dtype=b2.dtype).at[:, :num_labels].set(b2)
    else:
        w2p, b2p = w2, b2

    # ---- Batch tile selection (sublane-aligned, VMEM-budgeted). ----
    if tile_b is None:
        tile_b = 8192                     # big tiles amortize per-grid-step overhead
    # Per-row VMEM: double-buffered x + double-buffered narrow out + f32
    # intermediates h (tb, hidden) and padded o (tb, n_pad).
    bytes_per_row = 2 * dim * isz + 2 * num_labels * osz + hidden * 4 + n_pad * 4
    budget_rows = (20 << 20) // max(bytes_per_row, 1)
    tile_b = min(tile_b, max(budget_rows, 8))
    # Keep >= 2 grid steps (when B allows) so ("parallel",) shards across both TCs on v7x.
    tile_b = min(tile_b, _round_up(max((B + 1) // 2, 1), 8))
    tile_b = max(8, (tile_b // 8) * 8)

    grid_len = pl.cdiv(B, tile_b)

    # ---- Right-sized VMEM budget (actual need + small margin). ----
    vmem_need = (
        2 * tile_b * dim * isz                                           # x double buffer
        + 2 * tile_b * num_labels * osz                                  # narrow out double buffer
        + 2 * (dim * hidden + hidden + hidden * n_pad + n_pad) * wsz     # weight buffers
        + tile_b * hidden * 4                                            # f32 h intermediate
        + tile_b * n_pad * 4                                             # f32 padded o intermediate
    )
    vmem_limit = int(min(vmem_need + (4 << 20), 64 << 20))

    kernel = functools.partial(_predictor_kernel, num_labels=num_labels)

    return pl.pallas_call(
        kernel,
        out_shape=jax.ShapeDtypeStruct((B, num_labels), feats.dtype),
        grid_spec=pltpu.PrefetchScalarGridSpec(
            num_scalar_prefetch=0,
            grid=(grid_len,),
            in_specs=[
                pl.BlockSpec((tile_b, dim), lambda i: (i, 0)),       # x tile (streamed)
                pl.BlockSpec((dim, hidden), lambda i: (0, 0)),       # W1 (constant -> DMA'd once)
                pl.BlockSpec((1, hidden), lambda i: (0, 0)),         # b1
                pl.BlockSpec((hidden, n_pad), lambda i: (0, 0)),     # W2 padded (constant, VMEM-only pad)
                pl.BlockSpec((1, n_pad), lambda i: (0, 0)),          # b2 padded
            ],
            out_specs=pl.BlockSpec((tile_b, num_labels), lambda i: (i, 0)),
        ),
        compiler_params=pltpu.CompilerParams(
            dimension_semantics=("parallel",),   # shards batch across TCs on v7x
            vmem_limit_bytes=vmem_limit,
        ),
    )(feats, w1, b1, w2p, b2p)


def reference_forward(feats, w1, b1, w2, b2):
    h = jnp.maximum(feats @ w1 + b1.reshape(1, -1), 0.0)
    return h @ w2 + b2.reshape(1, -1)


if __name__ == "__main__":
    # Small shapes consistent with the module: Predictor(dim=32, num_labels=2).
    B, dim, num_labels = 16, 32, 2
    hidden = 2 * dim

    key = jax.random.PRNGKey(0)
    k_x, k_w1, k_b1, k_w2, k_b2 = jax.random.split(key, 5)

    feats = jax.random.normal(k_x, (B, dim), dtype=jnp.float32)

    # Deterministic synthetic parameter init (uniform, PyTorch-Linear-like scale).
    bound1 = 1.0 / (dim ** 0.5)
    bound2 = 1.0 / (hidden ** 0.5)
    w1 = jax.random.uniform(k_w1, (dim, hidden), jnp.float32, -bound1, bound1)
    b1 = jax.random.uniform(k_b1, (hidden,), jnp.float32, -bound1, bound1)
    w2 = jax.random.uniform(k_w2, (hidden, num_labels), jnp.float32, -bound2, bound2)
    b2 = jax.random.uniform(k_b2, (num_labels,), jnp.float32, -bound2, bound2)

    # 1) f32 path, tile_b=8 -> 2 grid steps, exercises the pipelined path. Strict check.
    out = jax.block_until_ready(predictor_forward(feats, w1, b1, w2, b2, tile_b=8))
    ref = reference_forward(feats, w1, b1, w2, b2)
    assert out.shape == (B, num_labels)
    assert jnp.allclose(out, ref, atol=1e-5, rtol=1e-5)

    # 2) Non-divisible batch (13 rows, tile_b=8): validates ragged-last-block masking
    #    that replaced the wrapper-side batch zero-pad + slice passes.
    out_odd = jax.block_until_ready(
        predictor_forward(feats[:13], w1, b1, w2, b2, tile_b=8))
    ref_odd = reference_forward(feats[:13], w1, b1, w2, b2)
    assert out_odd.shape == (13, num_labels)
    assert jnp.allclose(out_odd, ref_odd, atol=1e-5, rtol=1e-5)

    # 3) bf16 streaming path (halved HBM bytes), f32 accumulation kept. Loose check
    #    against a reference computed on the same bf16-rounded inputs.
    to_bf16 = lambda a: a.astype(jnp.bfloat16)
    out_bf16 = jax.block_until_ready(
        predictor_forward(to_bf16(feats), to_bf16(w1), to_bf16(b1),
                          to_bf16(w2), to_bf16(b2), tile_b=8))
    ref_bf16 = reference_forward(
        to_bf16(feats).astype(jnp.float32), to_bf16(w1).astype(jnp.float32),
        to_bf16(b1).astype(jnp.float32), to_bf16(w2).astype(jnp.float32),
        to_bf16(b2).astype(jnp.float32))
    assert out_bf16.shape == (B, num_labels)
    assert jnp.allclose(out_bf16.astype(jnp.float32), ref_bf16, atol=5e-2, rtol=5e-2)

    print("KERNEL_OK")
</pallas_src>

<mosaic_0001>
module attributes {stable_mosaic.version = 11 : i64} {
  func.func @_predictor_kernel(%arg0: i32, %arg1: memref<8x32xf32, #tpu.memory_space<vmem>>, %arg2: memref<32x64xf32, #tpu.memory_space<vmem>>, %arg3: memref<1x64xf32, #tpu.memory_space<vmem>>, %arg4: memref<64x128xf32, #tpu.memory_space<vmem>>, %arg5: memref<1x128xf32, #tpu.memory_space<vmem>>, %arg6: memref<8x2xf32, #tpu.memory_space<vmem>>) attributes {dimension_semantics = [#tpu.dimension_semantics<parallel>], iteration_bounds = array<i64: 2>, scalar_prefetch = 0 : i64, scratch_operands = 0 : i64, tpu.core_type = #tpu.core_type<tc>, window_params = [{transform_indices = @transform_0, window_bounds = array<i64: 8, 32>}, {pipeline_mode = #tpu.pipeline_mode<synchronous>, transform_indices = @transform_1, window_bounds = array<i64: 32, 64>}, {pipeline_mode = #tpu.pipeline_mode<synchronous>, transform_indices = @transform_2, window_bounds = array<i64: 1, 64>}, {pipeline_mode = #tpu.pipeline_mode<synchronous>, transform_indices = @transform_3, window_bounds = array<i64: 64, 128>}, {pipeline_mode = #tpu.pipeline_mode<synchronous>, transform_indices = @transform_4, window_bounds = array<i64: 1, 128>}, {transform_indices = @transform_5, window_bounds = array<i64: 8, 2>}]} {
    %c0 = arith.constant 0 : index
    %c0_0 = arith.constant 0 : index
    %0 = vector.load %arg1[%c0, %c0_0] : memref<8x32xf32, #tpu.memory_space<vmem>>, vector<8x32xf32>
    %c0_1 = arith.constant 0 : index
    %c0_2 = arith.constant 0 : index
    %1 = vector.load %arg2[%c0_1, %c0_2] : memref<32x64xf32, #tpu.memory_space<vmem>>, vector<32x64xf32>
    %cst = arith.constant dense<0.000000e+00> : vector<8x64xf32>
    %2 = tpu.matmul %0, %1, %cst {dimension_numbers = #tpu.dot_dimension_numbers<[1], [0], [0], [1], [0, 0, 1, 1], [], []>} : vector<8x32xf32>, vector<32x64xf32>, vector<8x64xf32> -> vector<8x64xf32>
    %c0_3 = arith.constant 0 : index
    %c0_4 = arith.constant 0 : index
    %3 = vector.load %arg3[%c0_3, %c0_4] : memref<1x64xf32, #tpu.memory_space<vmem>>, vector<1x64xf32>
    %4 = vector.broadcast %3 : vector<1x64xf32> to vector<8x64xf32>
    %5 = arith.addf %2, %4 : vector<8x64xf32>
    %cst_5 = arith.constant 0.000000e+00 : f32
    %6 = vector.broadcast %cst_5 : f32 to vector<8x64xf32>
    %7 = arith.maximumf %5, %6 : vector<8x64xf32>
    %c0_6 = arith.constant 0 : index
    %c0_7 = arith.constant 0 : index
    %8 = vector.load %arg4[%c0_6, %c0_7] : memref<64x128xf32, #tpu.memory_space<vmem>>, vector<64x128xf32>
    %cst_8 = arith.constant dense<0.000000e+00> : vector<8x128xf32>
    %9 = tpu.matmul %7, %8, %cst_8 {dimension_numbers = #tpu.dot_dimension_numbers<[1], [0], [0], [1], [0, 0, 1, 1], [], []>} : vector<8x64xf32>, vector<64x128xf32>, vector<8x128xf32> -> vector<8x128xf32>
    %c0_9 = arith.constant 0 : index
    %c0_10 = arith.constant 0 : index
    %10 = vector.load %arg5[%c0_9, %c0_10] : memref<1x128xf32, #tpu.memory_space<vmem>>, vector<1x128xf32>
    %11 = vector.broadcast %10 : vector<1x128xf32> to vector<8x128xf32>
    %12 = arith.addf %9, %11 : vector<8x128xf32>
    %13 = vector.extract_strided_slice %12 {offsets = [0, 0], sizes = [8, 2], strides = [1, 1]} : vector<8x128xf32> to vector<8x2xf32>
    %c0_11 = arith.constant 0 : index
    %c0_12 = arith.constant 0 : index
    %14 = vector.load %arg6[%c0_11, %c0_12] : memref<8x2xf32, #tpu.memory_space<vmem>>, vector<8x2xf32>
    tpu.vector_store %arg6[%c0_11, %c0_12], %13 {strides = array<i32>} : memref<8x2xf32, #tpu.memory_space<vmem>>, vector<8x2xf32>,
    return
  }
  func.func @transform_0(%arg0: i32) -> (i32, i32) {
    %c0_i32 = arith.constant 0 : i32
    %c0_i32_0 = arith.constant 0 : i32
    return %arg0, %c0_i32 : i32, i32
  }
  func.func @transform_1(%arg0: i32) -> (i32, i32) {
    %c0_i32 = arith.constant 0 : i32
    %c0_i32_0 = arith.constant 0 : i32
    %c0_i32_1 = arith.constant 0 : i32
    return %c0_i32, %c0_i32_0 : i32, i32
  }
  func.func @transform_2(%arg0: i32) -> (i32, i32) {
    %c0_i32 = arith.constant 0 : i32
    %c0_i32_0 = arith.constant 0 : i32
    %c0_i32_1 = arith.constant 0 : i32
    return %c0_i32, %c0_i32_0 : i32, i32
  }
  func.func @transform_3(%arg0: i32) -> (i32, i32) {
    %c0_i32 = arith.constant 0 : i32
    %c0_i32_0 = arith.constant 0 : i32
    %c0_i32_1 = arith.constant 0 : i32
    return %c0_i32, %c0_i32_0 : i32, i32
  }
  func.func @transform_4(%arg0: i32) -> (i32, i32) {
    %c0_i32 = arith.constant 0 : i32
    %c0_i32_0 = arith.constant 0 : i32
    %c0_i32_1 = arith.constant 0 : i32
    return %c0_i32, %c0_i32_0 : i32, i32
  }
  func.func @transform_5(%arg0: i32) -> (i32, i32) {
    %c0_i32 = arith.constant 0 : i32
    %c0_i32_0 = arith.constant 0 : i32
    return %arg0, %c0_i32 : i32, i32
  }
}

</mosaic_0001>

<llo_original>
// kernel: tpu_custom_call.1
$region0: #{tpu_custom_call.1}
  #allocation0 [shape = 'u32[]', space=smem, size = 0x4, offset = 0x4, fixed_abs, tag = 'smem constant byte address 0x4 - core index']
  #allocation1 [shape = 'u32[72,128]{1,0:T(1,128)}', space=vmem, size = 0x9000, scoped, tag = 'internal scratch']
  %s0 = inlined_call_operand.hbm [shape: f32[16,32], index: 0, kind: input, shape index: {}]
  %s1 = inlined_call_operand.hbm [shape: f32[32,64], index: 1, kind: input, shape index: {}]
  %s2 = inlined_call_operand.vmem [shape: f32[1,64], index: 2, kind: input, shape index: {}]
  %s3 = inlined_call_operand.hbm [shape: f32[64,128], index: 3, kind: input, shape index: {}]
  %s4 = inlined_call_operand.vmem [shape: f32[1,128], index: 4, kind: input, shape index: {}]
  %s5 = inlined_call_operand.vmem [shape: f32[16,2], index: 5, kind: output, shape index: {}]
  %s6 = sld [smem:[#allocation0]]
  $region65: #{tpu_custom_call.1} parent=0
    _
  %s8 = ssub.s32 1, %s6
  %s9 = scalar_select 0, %s8, %s6
  $region1: #{tpu_custom_call.1} parent=0
    #allocation2 [shape = 'u8[8192]{0}', space=vmem, size = 0x2000, scoped, tag = 'input window, operand 0']
    #allocation3 [shape = 's32[2]{0}', space=sflag, size = 0x8, scoped, tag = 'scoped memory for tpu_custom_call.1']
    #allocation4 [shape = 'u8[16384]{0}', space=vmem, size = 0x4000, scoped, tag = 'input window, operand 1, single buffered']
    #allocation5 [shape = 's32[1]{0}', space=sflag, size = 0x4, scoped, tag = 'scoped memory for tpu_custom_call.1']
    #allocation6 [shape = 'u8[32768]{0}', space=vmem, size = 0x8000, scoped, tag = 'input window, operand 3, single buffered']
    %10 = vsyncpa [#allocation3], 0
    %s11 = scalar_lea.sflag [#allocation3], 1
    %12 = vsyncpa %s11, 0
    %13 = vsyncpa [#allocation5], 0
    loop: start=0, step=1, limit=4
    $region2: #{tpu_custom_call.1} parent=1 // loop_pre_header
      _
    $region3: #{tpu_custom_call.1} parent=1 // loop_header
      %s15 = sphi 0, %s19
      %p16 = scmp.ge.s32.totalorder %s15, 4
      %s25 = sphi 0, %s27
      %s28 = sphi 0, %s25
      %s29 = sphi 0, %s28
      %s45 = sphi 0, %s29
      %s49 = sphi 0, %s49
      %s51 = sphi 0, %s49
      %s52 = sphi 0, %s51
      %s66 = sphi 0, %s52
      %s70 = sphi 0, %s70
      %s72 = sphi 0, %s70
      %s73 = sphi 0, %s72
      %s87 = sphi 0, %s73
      %s91 = sphi 0, %s91
      %s93 = sphi 0, %s91
      %s94 = sphi 0, %s93
      %s108 = sphi 0, %s94
      %s112 = sphi 0, %s112
      %s114 = sphi 0, %s112
      %s115 = sphi 0, %s114
      %s129 = sphi 0, %s115
      %s135 = sphi 0, %s137
      %s138 = sphi 0, %s135
      %s139 = sphi 0, %s138
      %s155 = sphi 0, %s139
    $region4: #{tpu_custom_call.1} parent=1 // loop_header_branch
      %18 = sbr.rel (%p16) target = $region8
    $region5: #{tpu_custom_call.1} parent=1 // loop_body
      %s20 = ssub.s32 %s15, 1
      %s21 = ssub.s32 %s15, 2
      %s22 = sadd.s32 %s15, 1
      %s23 = ssub.s32 %s15, %s22
      %p24 = scmp.eq.s32.totalorder %s23, 0
      %s26 = sadd.s32 %s25, 1
      %s27 = scalar_select %p24, %s25, %s26
      %p30 = pneg %p24
      %p31 = scmp.eq.s32.totalorder %s15, 1
      %p32 = por %p30, %p31
      %p33 = scmp.ne.s32.totalorder %s25, %s28
      %p34 = scmp.eq.s32.totalorder %s15, 0
      %p35 = por %p33, %p34
      %p36 = scmp.ne.s32.totalorder %s25, %s28
      %p37 = scmp.eq.s32.totalorder %s20, 1
      %p38 = por %p36, %p37
      %p39 = scmp.ne.s32.totalorder %s28, %s29
      %p40 = scmp.eq.s32.totalorder %s20, 0
      %p41 = por %p39, %p40
      %p42 = scmp.ne.s32.totalorder %s28, %s29
      %p43 = scmp.eq.s32.totalorder %s21, 1
      %p44 = por %p42, %p43
      %p46 = scmp.ne.s32.totalorder %s29, %s45
      %p47 = scmp.eq.s32.totalorder %s21, 0
      %p48 = por %p46, %p47
      %s50 = sadd.s32 %s49, 1
      %p53 = scmp.eq.s32.totalorder %s15, 1
      %p54 = scmp.ne.s32.totalorder %s49, %s51
      %p55 = scmp.eq.s32.totalorder %s15, 0
      %p56 = por %p54, %p55
      %p57 = scmp.ne.s32.totalorder %s49, %s51
      %p58 = scmp.eq.s32.totalorder %s20, 1
      %p59 = por %p57, %p58
      %p60 = scmp.ne.s32.totalorder %s51, %s52
      %p61 = scmp.eq.s32.totalorder %s20, 0
      %p62 = por %p60, %p61
      %p63 = scmp.ne.s32.totalorder %s51, %s52
      %p64 = scmp.eq.s32.totalorder %s21, 1
      %p65 = por %p63, %p64
      %p67 = scmp.ne.s32.totalorder %s52, %s66
      %p68 = scmp.eq.s32.totalorder %s21, 0
      %p69 = por %p67, %p68
      %s71 = sadd.s32 %s70, 1
      %p74 = scmp.eq.s32.totalorder %s15, 1
      %p75 = scmp.ne.s32.totalorder %s70, %s72
      %p76 = scmp.eq.s32.totalorder %s15, 0
      %p77 = por %p75, %p76
      %p78 = scmp.ne.s32.totalorder %s70, %s72
      %p79 = scmp.eq.s32.totalorder %s20, 1
      %p80 = por %p78, %p79
      %p81 = scmp.ne.s32.totalorder %s72, %s73
      %p82 = scmp.eq.s32.totalorder %s20, 0
      %p83 = por %p81, %p82
      %p84 = scmp.ne.s32.totalorder %s72, %s73
      %p85 = scmp.eq.s32.totalorder %s21, 1
      %p86 = por %p84, %p85
      %p88 = scmp.ne.s32.totalorder %s73, %s87
      %p89 = scmp.eq.s32.totalorder %s21, 0
      %p90 = por %p88, %p89
      %s92 = sadd.s32 %s91, 1
      %p95 = scmp.eq.s32.totalorder %s15, 1
      %p96 = scmp.ne.s32.totalorder %s91, %s93
      %p97 = scmp.eq.s32.totalorder %s15, 0
      %p98 = por %p96, %p97
      %p99 = scmp.ne.s32.totalorder %s91, %s93
      %p100 = scmp.eq.s32.totalorder %s20, 1
      %p101 = por %p99, %p100
      %p102 = scmp.ne.s32.totalorder %s93, %s94
      %p103 = scmp.eq.s32.totalorder %s20, 0
      %p104 = por %p102, %p103
      %p105 = scmp.ne.s32.totalorder %s93, %s94
      %p106 = scmp.eq.s32.totalorder %s21, 1
      %p107 = por %p105, %p106
      %p109 = scmp.ne.s32.totalorder %s94, %s108
      %p110 = scmp.eq.s32.totalorder %s21, 0
      %p111 = por %p109, %p110
      %s113 = sadd.s32 %s112, 1
      %p116 = scmp.eq.s32.totalorder %s15, 1
      %p117 = scmp.ne.s32.totalorder %s112, %s114
      %p118 = scmp.eq.s32.totalorder %s15, 0
      %p119 = por %p117, %p118
      %p120 = scmp.ne.s32.totalorder %s112, %s114
      %p121 = scmp.eq.s32.totalorder %s20, 1
      %p122 = por %p120, %p121
      %p123 = scmp.ne.s32.totalorder %s114, %s115
      %p124 = scmp.eq.s32.totalorder %s20, 0
      %p125 = por %p123, %p124
      %p126 = scmp.ne.s32.totalorder %s114, %s115
      %p127 = scmp.eq.s32.totalorder %s21, 1
      %p128 = por %p126, %p127
      %p130 = scmp.ne.s32.totalorder %s115, %s129
      %p131 = scmp.eq.s32.totalorder %s21, 0
      %p132 = por %p130, %p131
      %s133 = ssub.s32 %s15, %s22
      %p134 = scmp.eq.s32.totalorder %s133, 0
      %s136 = sadd.s32 %s135, 1
      %s137 = scalar_select %p134, %s135, %s136
      %p140 = pneg %p134
      %p141 = scmp.eq.s32.totalorder %s15, 1
      %p142 = por %p140, %p141
      %p143 = scmp.ne.s32.totalorder %s135, %s138
      %p144 = scmp.eq.s32.totalorder %s15, 0
      %p145 = por %p143, %p144
      %p146 = scmp.ne.s32.totalorder %s135, %s138
      %p147 = scmp.eq.s32.totalorder %s20, 1
      %p148 = por %p146, %p147
      %p149 = scmp.ne.s32.totalorder %s138, %s139
      %p150 = scmp.eq.s32.totalorder %s20, 0
      %p151 = por %p149, %p150
      %p152 = scmp.ne.s32.totalorder %s138, %s139
      %p153 = scmp.eq.s32.totalorder %s21, 1
      %p154 = por %p152, %p153
      %p156 = scmp.ne.s32.totalorder %s139, %s155
      %p157 = scmp.eq.s32.totalorder %s21, 0
      %p158 = por %p156, %p157
      %p159 = scmp.le.s32.totalorder 1, %s15
      %p160 = scmp.lt.s32.totalorder %s15, 3
      %p161 = pnand %p159, %p160
      %p162 = pneg %p161
      // Predicated region
      $region9: #{tpu_custom_call.1} parent=5 // pred_check
        _
      $region10: #{tpu_custom_call.1} parent=5 // pred_check_branch
        %164 = sbr.rel (%p161) target = $region12
      $region11: #{tpu_custom_call.1} parent=5 // pred_region
        %s165 = ssub.s32 %s15, 1
        // Predicated region
        $region13: #{tpu_custom_call.1} parent=11 // pred_check
          %p166 = pneg %p62
        $region14: #{tpu_custom_call.1} parent=11 // pred_check_branch
          %168 = sbr.rel (%p166) target = $region16
        $region15: #{tpu_custom_call.1} parent=11 // pred_region
          %170 = vsyncadd [#allocation5], 0
          %s171 = sshll.u32 %s1, 4
          %s172 = int_to_ptr.hbm [resolvable:$true] %s171
          %s173 = sshll.u32 [#allocation4], 4
          %s174 = int_to_ptr.vmem [resolvable:$true] %s173
          %179 = dma.hbm_to_vmem [thread:$0]  %s172, 512, %s174, [#allocation5], 128, 128, 8
        $region16: #{tpu_custom_call.1} parent=11 // pred_fallthru
          _
        // Predicated region
        $region17: #{tpu_custom_call.1} parent=11 // pred_check
          %p180 = pneg %p83
        $region18: #{tpu_custom_call.1} parent=11 // pred_check_branch
          %182 = sbr.rel (%p180) target = $region20
        $region19: #{tpu_custom_call.1} parent=11 // pred_region
          _
        $region20: #{tpu_custom_call.1} parent=11 // pred_fallthru
          _
        // Predicated region
        $region21: #{tpu_custom_call.1} parent=11 // pred_check
          %p183 = pneg %p104
        $region22: #{tpu_custom_call.1} parent=11 // pred_check_branch
          %185 = sbr.rel (%p183) target = $region24
        $region23: #{tpu_custom_call.1} parent=11 // pred_region
          %187 = vsyncadd [#allocation5], 0
          %s188 = sshll.u32 %s3, 4
          %s189 = int_to_ptr.hbm [resolvable:$true] %s188
          %s190 = sshll.u32 [#allocation6], 4
          %s191 = int_to_ptr.vmem [resolvable:$true] %s190
          %196 = dma.hbm_to_vmem [thread:$0]  %s189, 1024, %s191, [#allocation5], 128, 128, 8
        $region24: #{tpu_custom_call.1} parent=11 // pred_fallthru
          _
        // Predicated region
        $region25: #{tpu_custom_call.1} parent=11 // pred_check
          %p197 = pneg %p125
        $region26: #{tpu_custom_call.1} parent=11 // pred_check_branch
          %199 = sbr.rel (%p197) target = $region28
        $region27: #{tpu_custom_call.1} parent=11 // pred_region
          _
        $region28: #{tpu_custom_call.1} parent=11 // pred_fallthru
          _
      $region12: #{tpu_custom_call.1} parent=5 // pred_fallthru
        _
      %p200 = scmp.lt.s32.totalorder %s15, 2
      // Predicated region
      $region29: #{tpu_custom_call.1} parent=5 // pred_check
        %p201 = pneg %p200
      $region30: #{tpu_custom_call.1} parent=5 // pred_check_branch
        %203 = sbr.rel (%p201) target = $region32
      $region31: #{tpu_custom_call.1} parent=5 // pred_region
        // Predicated region
        $region33: #{tpu_custom_call.1} parent=31 // pred_check
          %p204 = pneg %p35
        $region34: #{tpu_custom_call.1} parent=31 // pred_check_branch
          %206 = sbr.rel (%p204) target = $region36
        $region35: #{tpu_custom_call.1} parent=31 // pred_region
          %s207 = sand.u32 %s25, 1
          %s208 = scalar_lea.sflag [#allocation3], %s207
          %s209 = sand.u32 %s25, 1
          %s210 = smul.addr %s209, 8
          %s211 = scalar_lea.vmem [#allocation2], %s210
          %213 = vsyncadd %s208, 0
          %s214 = smul.addr %s15, 8
          %s215 = scalar_lea.hbm %s0, %s214
          %s217 = sshll.u32 %s215, 4
          %s218 = int_to_ptr.hbm [resolvable:$true] %s217
          %s219 = sshll.u32 %s211, 4
          %s220 = int_to_ptr.vmem [resolvable:$true] %s219
          %222 = dma.hbm_to_vmem [thread:$0]  %s218, 128, %s220, %s208
        $region36: #{tpu_custom_call.1} parent=31 // pred_fallthru
          _
      $region32: #{tpu_custom_call.1} parent=5 // pred_fallthru
        _
      %p223 = scmp.le.s32.totalorder 1, %s15
      %p224 = scmp.lt.s32.totalorder %s15, 3
      %p225 = pnand %p223, %p224
      %p226 = pneg %p225
      // Predicated region
      $region37: #{tpu_custom_call.1} parent=5 // pred_check
        _
      $region38: #{tpu_custom_call.1} parent=5 // pred_check_branch
        %228 = sbr.rel (%p225) target = $region40
      $region39: #{tpu_custom_call.1} parent=5 // pred_region
        %s229 = ssub.s32 %s15, 1
        %s230 = sand.u32 %s28, 1
        %s231 = scalar_lea.sflag [#allocation3], %s230
        %s232 = sand.u32 %s28, 1
        %s233 = smul.addr %s232, 8
        %s234 = scalar_lea.vmem [#allocation2], %s233
        // Predicated region
        $region41: #{tpu_custom_call.1} parent=39 // pred_check
          %p235 = pneg %p41
        $region42: #{tpu_custom_call.1} parent=39 // pred_check_branch
          %237 = sbr.rel (%p235) target = $region44
        $region43: #{tpu_custom_call.1} parent=39 // pred_region
          %239 = dma.done %s231, 128
        $region44: #{tpu_custom_call.1} parent=39 // pred_fallthru
          _
        // Predicated region
        $region45: #{tpu_custom_call.1} parent=39 // pred_check
          %p240 = pneg %p62
        $region46: #{tpu_custom_call.1} parent=39 // pred_check_branch
          %242 = sbr.rel (%p240) target = $region48
        $region47: #{tpu_custom_call.1} parent=39 // pred_region
          %244 = dma.done [#allocation5], 512
        $region48: #{tpu_custom_call.1} parent=39 // pred_fallthru
          _
        // Predicated region
        $region49: #{tpu_custom_call.1} parent=39 // pred_check
          %p245 = pneg %p104
        $region50: #{tpu_custom_call.1} parent=39 // pred_check_branch
          %247 = sbr.rel (%p245) target = $region52
        $region51: #{tpu_custom_call.1} parent=39 // pred_region
          %249 = dma.done [#allocation5], 1024
        $region52: #{tpu_custom_call.1} parent=39 // pred_fallthru
          _
        %s250 = sand.u32 %s28, 1
        %s251 = scalar_lea.sflag [#allocation3], %s250
        %s252 = sand.u32 %s28, 1
        %s253 = smul.addr %s252, 8
        %s254 = scalar_lea.vmem [#allocation2], %s253
        %p255 = pneg %p41
        %p256 = pneg %p38
        %p257 = pneg %p62
        %p258 = pneg %p59
        %p259 = pneg %p83
        %p260 = pneg %p80
        %p261 = pneg %p104
        %p262 = pneg %p101
        %p263 = pneg %p125
        %p264 = pneg %p122
        %p265 = pneg %p151
        %p266 = pneg %p148
        %p267 = scmp.lt.s32.totalorder %s20, 1
        %s268 = scalar_select %p267, %s20, 1
        %s269 = smul.addr %s268, 8
        %s270 = scalar_lea.vmem %s5, %s269
        %p271 = scmp.lt.s32.totalorder %s20, 1
        %s272 = scalar_select %p271, %s20, 1
        %s273 = smul.addr %s272, 8
        %s274 = scalar_lea.vmem %s5, %s273
        %v275 = vld [vmem:[%s234] sm:$0xff]
        %v276 = vld [vmem:[#allocation4] sm:$0xff]
        %v277 = vld [vmem:[#allocation4 + $0x8] sm:$0xff]
        %v278 = vld [vmem:[#allocation4 + $0x10] sm:$0xff]
        %v279 = vld [vmem:[#allocation4 + $0x18] sm:$0xff]
        %v280 = vld [vmem:[%s2] sm:$0x1]
        %v282 = vperm.slane %v280, 0
        %vm284 = vcmask 261120
        %v286 = vsel %vm284, %v275, 0
        %288 = vmatpush.msra.mxu0 0.0
        %289 = vmatpush.msra.mxu0 0.0
        %290 = vmatpush.msra.mxu0 0.0
        %291 = vmatpush.msra.mxu0 0.0
        %292 = vmatpush.msra.mxu0 0.0
        %293 = vmatpush.msra.mxu0 0.0
        %294 = vmatpush.msra.mxu0 0.0
        %295 = vmatpush.msra.mxu0 0.0
        %296 = vmatpush.msra.mxu0 0.0
        %297 = vmatpush.msra.mxu0 0.0
        %298 = vmatpush.msra.mxu0 0.0
        %299 = vmatpush.msra.mxu0 0.0
        %300 = vmatpush.msra.mxu0 %v279
        %301 = vmatpush.msra.mxu0 %v278
        %302 = vmatpush.msra.mxu0 %v277
        %303 = vmatpush.msra.mxu0 %v276
        %304 = vmatmul.f32.gmra.mxu0 %v286
        %v305 = vpop.f32.mrf.mxu0
        %v306 = vadd.f32 %v282, %v305
        %307 = vdwg.mxu0
        %v308 = vmax.f32 %v306, 0.0
        %v309 = vld [vmem:[#allocation6] sm:$0xff]
        %v310 = vld [vmem:[#allocation6 + $0x8] sm:$0xff]
        %v311 = vld [vmem:[#allocation6 + $0x10] sm:$0xff]
        %v312 = vld [vmem:[#allocation6 + $0x18] sm:$0xff]
        %v313 = vld [vmem:[#allocation6 + $0x20] sm:$0xff]
        %v314 = vld [vmem:[#allocation6 + $0x28] sm:$0xff]
        %v315 = vld [vmem:[#allocation6 + $0x30] sm:$0xff]
        %v316 = vld [vmem:[#allocation6 + $0x38] sm:$0xff]
        %v317 = vld [vmem:[%s4] sm:$0x1]
        %v319 = vperm.slane %v317, 0
        %vm321 = vcmask 523264
        %v323 = vsel %vm321, %v308, 0
        %325 = vmatpush.msra.mxu0 0.0
        %326 = vmatpush.msra.mxu0 0.0
        %327 = vmatpush.msra.mxu0 0.0
        %328 = vmatpush.msra.mxu0 0.0
        %329 = vmatpush.msra.mxu0 0.0
        %330 = vmatpush.msra.mxu0 0.0
        %331 = vmatpush.msra.mxu0 0.0
        %332 = vmatpush.msra.mxu0 0.0
        %333 = vmatpush.msra.mxu0 %v316
        %334 = vmatpush.msra.mxu0 %v315
        %335 = vmatpush.msra.mxu0 %v314
        %336 = vmatpush.msra.mxu0 %v313
        %337 = vmatpush.msra.mxu0 %v312
        %338 = vmatpush.msra.mxu0 %v311
        %339 = vmatpush.msra.mxu0 %v310
        %340 = vmatpush.msra.mxu0 %v309
        %341 = vmatmul.f32.gmra.mxu0 %v323
        %v342 = vpop.f32.mrf.mxu0
        %v343 = vadd.f32 %v319, %v342
        %344 = vdwg.mxu0
        %vm345 = vcmask 15360
        %346 = vst.msk [vmem:[%s274] sm:$0xff] %vm345, %v343
        %p347 = scmp.lt.s32.totalorder %s20, 1
        %s348 = scalar_select %p347, %s20, 1
        %s349 = smul.addr %s348, 8
        %s350 = scalar_lea.vmem %s5, %s349
        // Predicated region
        $region53: #{tpu_custom_call.1} parent=39 // pred_check
          %p351 = pneg %p148
        $region54: #{tpu_custom_call.1} parent=39 // pred_check_branch
          %353 = sbr.rel (%p351) target = $region56
        $region55: #{tpu_custom_call.1} parent=39 // pred_region
          _
        $region56: #{tpu_custom_call.1} parent=39 // pred_fallthru
          _
      $region40: #{tpu_custom_call.1} parent=5 // pred_fallthru
        _
      %p354 = scmp.le.s32.totalorder 2, %s15
      // Predicated region
      $region57: #{tpu_custom_call.1} parent=5 // pred_check
        %p355 = pneg %p354
      $region58: #{tpu_custom_call.1} parent=5 // pred_check_branch
        %357 = sbr.rel (%p355) target = $region60
      $region59: #{tpu_custom_call.1} parent=5 // pred_region
        %s358 = ssub.s32 %s15, 2
        // Predicated region
        $region61: #{tpu_custom_call.1} parent=59 // pred_check
          %p359 = pneg %p154
        $region62: #{tpu_custom_call.1} parent=59 // pred_check_branch
          %361 = sbr.rel (%p359) target = $region64
        $region63: #{tpu_custom_call.1} parent=59 // pred_region
          %p362 = scmp.lt.s32.totalorder %s21, 1
          %s363 = scalar_select %p362, %s21, 1
          %s364 = smul.addr %s363, 8
          %s365 = scalar_lea.vmem %s5, %s364
        $region64: #{tpu_custom_call.1} parent=59 // pred_fallthru
          _
      $region60: #{tpu_custom_call.1} parent=5 // pred_fallthru
        _
    $region6: #{tpu_custom_call.1} parent=1 // loop_footer
      %s19 = sadd.s32 1, %s15
    $region7: #{tpu_custom_call.1} parent=1 // loop_footer_branch
      %14 = sbr.rel target = $region3
    $region8: #{tpu_custom_call.1} parent=1 // loop_exit
      _
    %366 = vsyncpa [#allocation3], 1
    %s367 = scalar_lea.sflag [#allocation3], 1
    %368 = vsyncpa %s367, 1
    %369 = vsyncpa [#allocation5], 1

</llo_original>
